<compile_context>
chip_gen: v7x
topology: tpu7x:2x2x1
jax: 0.10.0
libtpu: 0.0.40
codegen_flags: <defaults>
</compile_context>

<pallas_src>
import functools

import jax
import jax.numpy as jnp
from jax.experimental import pallas as pl
from jax.experimental.pallas import tpu as pltpu

_MIB = 1024 * 1024
_MXU_MIN_D = 32  # below this, unrolled VPU FMA beats a badly underfilled MXU matmul


def _cdiv(a, b):
    return -(-a // b)


def _round_down(x, m):
    return (x // m) * m


def _cam_mxu_kernel(w_ref, fm_ref, out_ref, *, nb):
    # w_ref: (C, D) resident classifier weights
    # fm_ref: (nb, D, T) spatial tile of nb samples; out_ref: (nb, C, T)
    w = w_ref[...]
    for b in range(nb):  # nb is small & static -> fully unrolled
        out_ref[b] = jnp.dot(
            w, fm_ref[b], preferred_element_type=jnp.float32
        ).astype(out_ref.dtype)


def _cam_vpu_kernel(w_ref, fm_ref, out_ref, *, nb, depth):
    # Small-D path: broadcast-FMA on the VPU; nb/depth static -> fully unrolled.
    w = w_ref[...].astype(jnp.float32)  # hoisted out of both loops
    for b in range(nb):
        fm_b = fm_ref[b].astype(jnp.float32)  # (D, T)
        acc = jnp.zeros(out_ref.shape[1:], jnp.float32)
        for d in range(depth):
            acc = acc + w[:, d : d + 1] * fm_b[d : d + 1, :]
        out_ref[b] = acc.astype(out_ref.dtype)


def _vmem_capacity_bytes():
    # Per-generation physical VMEM (128 MiB v5e/v6e, 64 MiB per TC on v7x).
    try:
        return int(pltpu.get_tpu_info().vmem_capacity_bytes)
    except Exception:  # query unavailable (e.g. interpret mode) -> v7x-safe size
        return 64 * _MIB


def _pick_hw_tile(HW, per_lane_step_bytes, budget_bytes):
    """Largest 128-multiple spatial tile (<= HW) whose double-buffered fm+out
    blocks fit the pipeline VMEM budget. HW <= 128 -> one full-extent block."""
    if HW <= 128:
        return HW
    tile = max(128, min(2048, _round_down(HW, 128)))
    while tile > 128 and per_lane_step_bytes * tile > budget_bytes:
        tile -= 128
    return tile


def _pick_nb(N, n_hw_tiles, per_sample_step_bytes, budget_bytes):
    """Samples per grid step: amortize per-step overhead for small spatial maps,
    keep >= ~8 total grid steps (v7x megacore) and stay inside the VMEM budget."""
    if N <= 1:
        return 1
    nb_budget = max(1, int(budget_bytes // max(1, per_sample_step_bytes)))
    total_steps = N * n_hw_tiles
    target_steps = min(8, total_steps)
    nb_steps = max(1, total_steps // target_steps)
    nb_cap = min(N, nb_budget, nb_steps, 8)
    nb = 1
    for cand in range(1, nb_cap + 1):  # largest divisor of N (keeps blocks even)
        if N % cand == 0:
            nb = cand
    return nb


def cam_forward(feature_map, classifier_weight):
    """feature_map: (N, D, H, W), classifier_weight: (C, D) -> (N, C, H, W)."""
    N, D, H, W = feature_map.shape
    C, Dw = classifier_weight.shape
    assert D == Dw, "channel dim mismatch"
    HW = H * W

    dtype = feature_map.dtype
    dtype_bytes = jnp.dtype(dtype).itemsize
    w_bytes = C * D * jnp.dtype(classifier_weight.dtype).itemsize

    # ---- per-generation VMEM budgeting (weights counted, single-buffered) ----
    capacity = _vmem_capacity_bytes()
    margin = 4 * _MIB  # Mosaic internal scratch etc.
    # fm/out double-buffer budget: <= 3/8 of physical VMEM (48 MiB v5e/v6e,
    # 24 MiB v7x), and leave room for the resident weight block.
    pipeline_budget = min((3 * capacity) // 8,
                          (3 * capacity) // 4 - w_bytes - margin)
    pipeline_budget = max(pipeline_budget, 2 * _MIB)

    per_lane_bytes = 2 * (D + C) * dtype_bytes  # double-buffered fm+out, per lane
    hw_tile = _pick_hw_tile(HW, per_lane_bytes, pipeline_budget)
    n_hw_tiles = _cdiv(HW, hw_tile)
    nb = _pick_nb(N, n_hw_tiles, per_lane_bytes * hw_tile, pipeline_budget)

    pipeline_bytes = per_lane_bytes * hw_tile * nb
    vmem_limit = int(min(max(w_bytes + pipeline_bytes + margin, 32 * _MIB),
                         capacity - 8 * _MIB))

    fm = feature_map.reshape(N, D, HW)  # no padding: tail tile is masked in-kernel

    if D >= _MXU_MIN_D:
        kernel = functools.partial(_cam_mxu_kernel, nb=nb)
    else:
        kernel = functools.partial(_cam_vpu_kernel, nb=nb, depth=D)

    cost = pl.CostEstimate(
        flops=2 * N * C * D * HW,
        transcendentals=0,
        bytes_accessed=dtype_bytes * (N * D * HW + N * C * HW) + w_bytes,
    )

    out = pl.pallas_call(
        kernel,
        out_shape=jax.ShapeDtypeStruct((N, C, HW), dtype),
        grid_spec=pltpu.PrefetchScalarGridSpec(
            num_scalar_prefetch=0,
            # Sample axis outermost so the weight block index never changes
            # (weights DMA'd once and stay resident in VMEM).
            grid=(N // nb, n_hw_tiles),
            in_specs=[
                # Constant block index -> single-buffer the resident weights
                # (a second pipeline buffer would be pure VMEM waste).
                pl.BlockSpec((C, D), lambda n, t: (0, 0),
                             pipeline_mode=pl.Buffered(1)),
                pl.BlockSpec((nb, D, hw_tile), lambda n, t: (n, 0, t)),
            ],
            out_specs=pl.BlockSpec((nb, C, hw_tile), lambda n, t: (n, 0, t)),
        ),
        compiler_params=pltpu.CompilerParams(
            dimension_semantics=("parallel", "parallel"),
            vmem_limit_bytes=vmem_limit,
        ),
        cost_estimate=cost,
    )(classifier_weight, fm)

    return out.reshape(N, C, H, W)


def cam_reference(feature_map, classifier_weight):
    # Direct einsum mirror of the PyTorch forward.
    return jnp.einsum("ndhw,cd->nchw", feature_map, classifier_weight)


if __name__ == "__main__":
    key = jax.random.PRNGKey(0)
    k_fm, k_w = jax.random.split(key)

    N, D, H, W = 2, 4, 16, 16   # batch, channels, spatial
    C = 8                       # number of classes (rows of classifier weight)

    feature_map = jax.random.normal(k_fm, (N, D, H, W), dtype=jnp.float32)
    classifier_weight = jax.random.normal(k_w, (C, D), dtype=jnp.float32)

    out = cam_forward(feature_map, classifier_weight)
    out = jax.block_until_ready(out)

    ref = cam_reference(feature_map, classifier_weight)
    assert out.shape == (N, C, H, W)
    assert jnp.allclose(out, ref, atol=1e-5, rtol=1e-5), "mismatch vs reference"

    print("KERNEL_OK")
</pallas_src>

<mosaic_0001>
module attributes {stable_mosaic.version = 11 : i64} {
  func.func @_cam_vpu_kernel(%arg0: i32, %arg1: i32, %arg2: memref<8x4xf32, #tpu.memory_space<vmem>>, %arg3: memref<1x4x256xf32, #tpu.memory_space<vmem>>, %arg4: memref<1x8x256xf32, #tpu.memory_space<vmem>>) attributes {dimension_semantics = [#tpu.dimension_semantics<parallel>, #tpu.dimension_semantics<parallel>], iteration_bounds = array<i64: 2, 1>, scalar_prefetch = 0 : i64, scratch_operands = 0 : i64, tpu.core_type = #tpu.core_type<tc>, window_params = [{pipeline_mode = #tpu.pipeline_mode<synchronous>, transform_indices = @transform_0, window_bounds = array<i64: 8, 4>}, {transform_indices = @transform_1, window_bounds = array<i64: 1, 4, 256>}, {transform_indices = @transform_2, window_bounds = array<i64: 1, 8, 256>}]} {
    %c0 = arith.constant 0 : index
    %c0_0 = arith.constant 0 : index
    %0 = vector.load %arg2[%c0, %c0_0] : memref<8x4xf32, #tpu.memory_space<vmem>>, vector<8x4xf32>
    %c0_1 = arith.constant 0 : index
    %c0_2 = arith.constant 0 : index
    %c0_3 = arith.constant 0 : index
    %1 = vector.load %arg3[%c0_1, %c0_2, %c0_3] : memref<1x4x256xf32, #tpu.memory_space<vmem>>, vector<1x4x256xf32>
    %2 = vector.shape_cast %1 : vector<1x4x256xf32> to vector<4x256xf32>
    %cst = arith.constant 0.000000e+00 : f32
    %3 = vector.broadcast %cst : f32 to vector<8x256xf32>
    %4 = vector.extract_strided_slice %0 {offsets = [0, 0], sizes = [8, 1], strides = [1, 1]} : vector<8x4xf32> to vector<8x1xf32>
    %5 = vector.extract_strided_slice %2 {offsets = [0, 0], sizes = [1, 256], strides = [1, 1]} : vector<4x256xf32> to vector<1x256xf32>
    %6 = vector.broadcast %4 : vector<8x1xf32> to vector<8x256xf32>
    %7 = vector.broadcast %5 : vector<1x256xf32> to vector<8x256xf32>
    %8 = arith.mulf %6, %7 : vector<8x256xf32>
    %9 = arith.addf %3, %8 : vector<8x256xf32>
    %10 = vector.extract_strided_slice %0 {offsets = [0, 1], sizes = [8, 1], strides = [1, 1]} : vector<8x4xf32> to vector<8x1xf32>
    %11 = vector.extract_strided_slice %2 {offsets = [1, 0], sizes = [1, 256], strides = [1, 1]} : vector<4x256xf32> to vector<1x256xf32>
    %12 = vector.broadcast %10 : vector<8x1xf32> to vector<8x256xf32>
    %13 = vector.broadcast %11 : vector<1x256xf32> to vector<8x256xf32>
    %14 = arith.mulf %12, %13 : vector<8x256xf32>
    %15 = arith.addf %9, %14 : vector<8x256xf32>
    %16 = vector.extract_strided_slice %0 {offsets = [0, 2], sizes = [8, 1], strides = [1, 1]} : vector<8x4xf32> to vector<8x1xf32>
    %17 = vector.extract_strided_slice %2 {offsets = [2, 0], sizes = [1, 256], strides = [1, 1]} : vector<4x256xf32> to vector<1x256xf32>
    %18 = vector.broadcast %16 : vector<8x1xf32> to vector<8x256xf32>
    %19 = vector.broadcast %17 : vector<1x256xf32> to vector<8x256xf32>
    %20 = arith.mulf %18, %19 : vector<8x256xf32>
    %21 = arith.addf %15, %20 : vector<8x256xf32>
    %22 = vector.extract_strided_slice %0 {offsets = [0, 3], sizes = [8, 1], strides = [1, 1]} : vector<8x4xf32> to vector<8x1xf32>
    %23 = vector.extract_strided_slice %2 {offsets = [3, 0], sizes = [1, 256], strides = [1, 1]} : vector<4x256xf32> to vector<1x256xf32>
    %24 = vector.broadcast %22 : vector<8x1xf32> to vector<8x256xf32>
    %25 = vector.broadcast %23 : vector<1x256xf32> to vector<8x256xf32>
    %26 = arith.mulf %24, %25 : vector<8x256xf32>
    %27 = arith.addf %21, %26 : vector<8x256xf32>
    %c0_4 = arith.constant 0 : index
    %c0_5 = arith.constant 0 : index
    %c0_6 = arith.constant 0 : index
    %28 = vector.load %arg4[%c0_4, %c0_5, %c0_6] : memref<1x8x256xf32, #tpu.memory_space<vmem>>, vector<1x8x256xf32>
    %29 = vector.shape_cast %28 : vector<1x8x256xf32> to vector<8x256xf32>
    %30 = vector.shape_cast %27 : vector<8x256xf32> to vector<1x8x256xf32>
    tpu.vector_store %arg4[%c0_4, %c0_5, %c0_6], %30 {strides = array<i32>} : memref<1x8x256xf32, #tpu.memory_space<vmem>>, vector<1x8x256xf32>,
    return
  }
  func.func @transform_0(%arg0: i32, %arg1: i32) -> (i32, i32) {
    %c0_i32 = arith.constant 0 : i32
    %c0_i32_0 = arith.constant 0 : i32
    %c0_i32_1 = arith.constant 0 : i32
    return %c0_i32, %c0_i32_0 : i32, i32
  }
  func.func @transform_1(%arg0: i32, %arg1: i32) -> (i32, i32, i32) {
    %c0_i32 = arith.constant 0 : i32
    %c0_i32_0 = arith.constant 0 : i32
    return %arg0, %c0_i32, %arg1 : i32, i32, i32
  }
  func.func @transform_2(%arg0: i32, %arg1: i32) -> (i32, i32, i32) {
    %c0_i32 = arith.constant 0 : i32
    %c0_i32_0 = arith.constant 0 : i32
    return %arg0, %c0_i32, %arg1 : i32, i32, i32
  }
}

</mosaic_0001>

<llo_original>
// kernel: tpu_custom_call.1
$region0: #{tpu_custom_call.1}
  #allocation0 [shape = 'u32[]', space=smem, size = 0x4, offset = 0x4, fixed_abs, tag = 'smem constant byte address 0x4 - core index']
  #allocation1 [shape = 'u32[144,128]{1,0:T(1,128)}', space=vmem, size = 0x12000, scoped, tag = 'internal scratch']
  %s0 = inlined_call_operand.vmem [shape: f32[8,4], index: 0, kind: input, shape index: {}]
  %s1 = inlined_call_operand.hbm [shape: f32[2,4,256], index: 1, kind: input, shape index: {}]
  %s2 = inlined_call_operand.hbm [shape: f32[2,8,256], index: 2, kind: output, shape index: {}]
  %s3 = sld [smem:[#allocation0]]
  $region45: #{tpu_custom_call.1} parent=0
    _
  %s5 = ssub.s32 1, %s3
  %s6 = scalar_select 0, %s5, %s3
  $region1: #{tpu_custom_call.1} parent=0
    #allocation2 [shape = 'u8[8192]{0}', space=vmem, size = 0x2000, scoped, tag = 'input window, operand 1']
    #allocation3 [shape = 's32[2]{0}', space=sflag, size = 0x8, scoped, tag = 'scoped memory for tpu_custom_call.1']
    #allocation4 [shape = 's32[2]{0}', space=sflag, size = 0x8, scoped, tag = 'scoped memory for tpu_custom_call.1']
    #allocation5 [shape = 'u8[16384]{0}', space=vmem, size = 0x4000, scoped, tag = 'output window, operand 0']
    %7 = vsyncpa [#allocation3], 0
    %s8 = scalar_lea.sflag [#allocation3], 1
    %9 = vsyncpa %s8, 0
    %10 = vsyncpa [#allocation4], 0
    %s11 = scalar_lea.sflag [#allocation4], 1
    %12 = vsyncpa %s11, 0
    loop: start=0, step=1, limit=4
    $region2: #{tpu_custom_call.1} parent=1 // loop_pre_header
      _
    $region3: #{tpu_custom_call.1} parent=1 // loop_header
      %s14 = sphi 0, %s18
      %p15 = scmp.ge.s32.totalorder %s14, 4
      %s21 = sphi 0, %s33
      %s22 = sphi 0, %s29
      %s23 = sphi 0, %s21
      %s24 = sphi 0, %s22
      %s25 = sphi 0, %s23
      %s26 = sphi 0, %s24
      %s34 = sphi 0, %s34
      %s36 = sphi 0, %s34
      %s37 = sphi 0, %s36
      %s51 = sphi 0, %s37
      %s59 = sphi 0, %s61
      %s62 = sphi 0, %s59
      %s63 = sphi 0, %s62
      %s79 = sphi 0, %s63
      %s87 = sphi 0, %s89
      %s90 = sphi 0, %s87
      %s91 = sphi 0, %s90
      %s107 = sphi 0, %s91
    $region4: #{tpu_custom_call.1} parent=1 // loop_header_branch
      %17 = sbr.rel (%p15) target = $region8
    $region5: #{tpu_custom_call.1} parent=1 // loop_body
      %s19 = ssub.s32 %s14, 1
      %s20 = ssub.s32 %s14, 2
      %s27 = sadd.s32 1, %s22
      %p28 = scmp.ge.s32.totalorder %s27, 1
      %s29 = scalar_select %p28, 0, %s27
      %s30 = sadd.s32 1, %s21
      %s31 = scalar_select %p28, %s30, %s21
      %p32 = scmp.ge.s32.totalorder %s31, 2
      %s33 = scalar_select %p32, 0, %s31
      %s35 = sadd.s32 %s34, 1
      %p38 = scmp.eq.s32.totalorder %s14, 1
      %p39 = scmp.ne.s32.totalorder %s34, %s36
      %p40 = scmp.eq.s32.totalorder %s14, 0
      %p41 = por %p39, %p40
      %p42 = scmp.ne.s32.totalorder %s34, %s36
      %p43 = scmp.eq.s32.totalorder %s19, 1
      %p44 = por %p42, %p43
      %p45 = scmp.ne.s32.totalorder %s36, %s37
      %p46 = scmp.eq.s32.totalorder %s19, 0
      %p47 = por %p45, %p46
      %p48 = scmp.ne.s32.totalorder %s36, %s37
      %p49 = scmp.eq.s32.totalorder %s20, 1
      %p50 = por %p48, %p49
      %p52 = scmp.ne.s32.totalorder %s37, %s51
      %p53 = scmp.eq.s32.totalorder %s20, 0
      %p54 = por %p52, %p53
      %s55 = ssub.s32 %s21, %s33
      %s56 = ssub.s32 %s22, %s29
      %s57 = sor.u32 %s55, %s56
      %p58 = scmp.eq.s32.totalorder %s57, 0
      %s60 = sadd.s32 %s59, 1
      %s61 = scalar_select %p58, %s59, %s60
      %p64 = pneg %p58
      %p65 = scmp.eq.s32.totalorder %s14, 1
      %p66 = por %p64, %p65
      %p67 = scmp.ne.s32.totalorder %s59, %s62
      %p68 = scmp.eq.s32.totalorder %s14, 0
      %p69 = por %p67, %p68
      %p70 = scmp.ne.s32.totalorder %s59, %s62
      %p71 = scmp.eq.s32.totalorder %s19, 1
      %p72 = por %p70, %p71
      %p73 = scmp.ne.s32.totalorder %s62, %s63
      %p74 = scmp.eq.s32.totalorder %s19, 0
      %p75 = por %p73, %p74
      %p76 = scmp.ne.s32.totalorder %s62, %s63
      %p77 = scmp.eq.s32.totalorder %s20, 1
      %p78 = por %p76, %p77
      %p80 = scmp.ne.s32.totalorder %s63, %s79
      %p81 = scmp.eq.s32.totalorder %s20, 0
      %p82 = por %p80, %p81
      %s83 = ssub.s32 %s21, %s33
      %s84 = ssub.s32 %s22, %s29
      %s85 = sor.u32 %s83, %s84
      %p86 = scmp.eq.s32.totalorder %s85, 0
      %s88 = sadd.s32 %s87, 1
      %s89 = scalar_select %p86, %s87, %s88
      %p92 = pneg %p86
      %p93 = scmp.eq.s32.totalorder %s14, 1
      %p94 = por %p92, %p93
      %p95 = scmp.ne.s32.totalorder %s87, %s90
      %p96 = scmp.eq.s32.totalorder %s14, 0
      %p97 = por %p95, %p96
      %p98 = scmp.ne.s32.totalorder %s87, %s90
      %p99 = scmp.eq.s32.totalorder %s19, 1
      %p100 = por %p98, %p99
      %p101 = scmp.ne.s32.totalorder %s90, %s91
      %p102 = scmp.eq.s32.totalorder %s19, 0
      %p103 = por %p101, %p102
      %p104 = scmp.ne.s32.totalorder %s90, %s91
      %p105 = scmp.eq.s32.totalorder %s20, 1
      %p106 = por %p104, %p105
      %p108 = scmp.ne.s32.totalorder %s91, %s107
      %p109 = scmp.eq.s32.totalorder %s20, 0
      %p110 = por %p108, %p109
      %p111 = scmp.le.s32.totalorder 1, %s14
      %p112 = scmp.lt.s32.totalorder %s14, 3
      %p113 = pnand %p111, %p112
      %p114 = pneg %p113
      // Predicated region
      $region9: #{tpu_custom_call.1} parent=5 // pred_check
        _
      $region10: #{tpu_custom_call.1} parent=5 // pred_check_branch
        %116 = sbr.rel (%p113) target = $region12
      $region11: #{tpu_custom_call.1} parent=5 // pred_region
        %s117 = ssub.s32 %s14, 1
        // Predicated region
        $region13: #{tpu_custom_call.1} parent=11 // pred_check
          %p118 = pneg %p47
        $region14: #{tpu_custom_call.1} parent=11 // pred_check_branch
          %120 = sbr.rel (%p118) target = $region16
        $region15: #{tpu_custom_call.1} parent=11 // pred_region
          _
        $region16: #{tpu_custom_call.1} parent=11 // pred_fallthru
          _
      $region12: #{tpu_custom_call.1} parent=5 // pred_fallthru
        _
      %p121 = scmp.lt.s32.totalorder %s14, 2
      // Predicated region
      $region17: #{tpu_custom_call.1} parent=5 // pred_check
        %p122 = pneg %p121
      $region18: #{tpu_custom_call.1} parent=5 // pred_check_branch
        %124 = sbr.rel (%p122) target = $region20
      $region19: #{tpu_custom_call.1} parent=5 // pred_region
        // Predicated region
        $region21: #{tpu_custom_call.1} parent=19 // pred_check
          %p125 = pneg %p69
        $region22: #{tpu_custom_call.1} parent=19 // pred_check_branch
          %127 = sbr.rel (%p125) target = $region24
        $region23: #{tpu_custom_call.1} parent=19 // pred_region
          %s128 = sand.u32 %s59, 1
          %s129 = scalar_lea.sflag [#allocation3], %s128
          %s130 = sand.u32 %s59, 1
          %s131 = smul.addr %s130, 8
          %s132 = scalar_lea.vmem [#allocation2], %s131
          %s133 = smul.u32 2, %s22
          %s135 = ssub.s32 128, 128
          %136 = vsyncadd %s129, %s135
          %s137 = smul.addr %s21, 2
          %s138 = sadd.s32 %s133, %s137
          %s139 = smul.addr %s138, 64
          %s140 = scalar_lea.hbm %s1, %s139
          %s142 = sshll.u32 %s132, 4
          %s143 = int_to_ptr.vmem [resolvable:$true] %s142
          %145 = dma.hbm_to_vmem [thread:$0]  %s140, 128, %s143, %s129
        $region24: #{tpu_custom_call.1} parent=19 // pred_fallthru
          _
      $region20: #{tpu_custom_call.1} parent=5 // pred_fallthru
        _
      %p146 = scmp.le.s32.totalorder 1, %s14
      %p147 = scmp.lt.s32.totalorder %s14, 3
      %p148 = pnand %p146, %p147
      %p149 = pneg %p148
      // Predicated region
      $region25: #{tpu_custom_call.1} parent=5 // pred_check
        _
      $region26: #{tpu_custom_call.1} parent=5 // pred_check_branch
        %151 = sbr.rel (%p148) target = $region28
      $region27: #{tpu_custom_call.1} parent=5 // pred_region
        %s152 = ssub.s32 %s14, 1
        %s153 = sand.u32 %s62, 1
        %s154 = scalar_lea.sflag [#allocation3], %s153
        %s155 = sand.u32 %s62, 1
        %s156 = smul.addr %s155, 8
        %s157 = scalar_lea.vmem [#allocation2], %s156
        // Predicated region
        $region29: #{tpu_custom_call.1} parent=27 // pred_check
          %p158 = pneg %p75
        $region30: #{tpu_custom_call.1} parent=27 // pred_check_branch
          %160 = sbr.rel (%p158) target = $region32
        $region31: #{tpu_custom_call.1} parent=27 // pred_region
          %161 = dma.done %s154, 128
        $region32: #{tpu_custom_call.1} parent=27 // pred_fallthru
          _
        %p162 = pneg %p47
        %p163 = pneg %p44
        %s164 = sand.u32 %s62, 1
        %s165 = scalar_lea.sflag [#allocation3], %s164
        %s166 = sand.u32 %s62, 1
        %s167 = smul.addr %s166, 8
        %s168 = scalar_lea.vmem [#allocation2], %s167
        %p169 = pneg %p75
        %p170 = pneg %p72
        %p171 = pneg %p103
        %p172 = pneg %p100
        %s173 = sand.u32 %s90, 1
        %s174 = scalar_lea.sflag [#allocation4], %s173
        %s175 = sand.u32 %s90, 1
        %s176 = smul.addr %s175, 16
        %s177 = scalar_lea.vmem [#allocation5], %s176
        %s178 = smul.u32 2, %s24
        %s179 = smul.u32 2, %s24
        %v180 = vld [vmem:[%s0] sm:$0xff]
        %v181 = vld [vmem:[%s157] sm:$0xff]
        %183 = vset.pattern.permute.xlu0 0
        %184 = vperm.xlu0 %183, %v180
        %v185 = vpop.permute.xlu0 %184
        %v188 = vlaneseq
        %v189 = vshrl.u32 %v188, 7
        %v190 = vsub.s32 0, %v189
        %v191 = vrot.slane %v181, %v190
        %v192 = vlaneseq
        %v193 = vshrl.u32 %v192, 7
        %v194 = vsub.s32 4, %v193
        %v195 = vrot.slane %v181, %v194
        %v198 = vlaneseq
        %v199 = vshrl.u32 %v198, 7
        %v200 = vsub.s32 0, %v199
        %v201 = vrot.slane %v191, %v200
        %v202 = vlaneseq
        %v203 = vshrl.u32 %v202, 7
        %v204 = vsub.s32 0, %v203
        %v205 = vrot.slane %v195, %v204
        %v206 = vmul.f32 %v185, %v201
        %v207 = vmul.f32 %v185, %v205
        %v208 = vadd.f32 %v206, 0.0
        %v209 = vadd.f32 %v207, 0.0
        %210 = vset.pattern.permute.xlu0 1
        %211 = vperm.xlu0 %210, %v180
        %v212 = vpop.permute.xlu0 %211
        %v214 = vlaneseq
        %v215 = vshrl.u32 %v214, 7
        %v216 = vsub.s32 1, %v215
        %v217 = vrot.slane %v181, %v216
        %v218 = vlaneseq
        %v219 = vshrl.u32 %v218, 7
        %v220 = vsub.s32 5, %v219
        %v221 = vrot.slane %v181, %v220
        %v224 = vlaneseq
        %v225 = vshrl.u32 %v224, 7
        %v226 = vsub.s32 1, %v225
        %v227 = vrot.slane %v217, %v226
        %v228 = vlaneseq
        %v229 = vshrl.u32 %v228, 7
        %v230 = vsub.s32 1, %v229
        %v231 = vrot.slane %v221, %v230
        %v232 = vmul.f32 %v212, %v227
        %v233 = vmul.f32 %v212, %v231
        %v234 = vadd.f32 %v208, %v232
        %v235 = vadd.f32 %v209, %v233
        %236 = vset.pattern.permute.xlu0 2
        %237 = vperm.xlu0 %236, %v180
        %v238 = vpop.permute.xlu0 %237
        %v240 = vlaneseq
        %v241 = vshrl.u32 %v240, 7
        %v242 = vsub.s32 2, %v241
        %v243 = vrot.slane %v181, %v242
        %v244 = vlaneseq
        %v245 = vshrl.u32 %v244, 7
        %v246 = vsub.s32 6, %v245
        %v247 = vrot.slane %v181, %v246
        %v250 = vlaneseq
        %v251 = vshrl.u32 %v250, 7
        %v252 = vsub.s32 2, %v251
        %v253 = vrot.slane %v243, %v252
        %v254 = vlaneseq
        %v255 = vshrl.u32 %v254, 7
        %v256 = vsub.s32 2, %v255
        %v257 = vrot.slane %v247, %v256
        %v258 = vmul.f32 %v238, %v253
        %v259 = vmul.f32 %v238, %v257
        %v260 = vadd.f32 %v234, %v258
        %v261 = vadd.f32 %v235, %v259
        %262 = vset.pattern.permute.xlu0 3
        %263 = vperm.xlu0 %262, %v180
        %v264 = vpop.permute.xlu0 %263
        %v266 = vlaneseq
        %v267 = vshrl.u32 %v266, 7
        %v268 = vsub.s32 3, %v267
        %v269 = vrot.slane %v181, %v268
        %v270 = vlaneseq
        %v271 = vshrl.u32 %v270, 7
        %v272 = vsub.s32 7, %v271
        %v273 = vrot.slane %v181, %v272
        %v276 = vlaneseq
        %v277 = vshrl.u32 %v276, 7
        %v278 = vsub.s32 3, %v277
        %v279 = vrot.slane %v269, %v278
        %v280 = vlaneseq
        %v281 = vshrl.u32 %v280, 7
        %v282 = vsub.s32 3, %v281
        %v283 = vrot.slane %v273, %v282
        %v284 = vmul.f32 %v264, %v279
        %v285 = vmul.f32 %v264, %v283
        %v286 = vadd.f32 %v260, %v284
        %v287 = vadd.f32 %v261, %v285
        %288 = vst [vmem:[%s177] sm:$0xff] %v286
        %289 = vst [vmem:[%s177 + $0x8] sm:$0xff] %v287
        %s290 = sand.u32 %s90, 1
        %s291 = scalar_lea.sflag [#allocation4], %s290
        %s292 = sand.u32 %s90, 1
        %s293 = smul.addr %s292, 16
        %s294 = scalar_lea.vmem [#allocation5], %s293
        // Predicated region
        $region33: #{tpu_custom_call.1} parent=27 // pred_check
          %p295 = pneg %p100
        $region34: #{tpu_custom_call.1} parent=27 // pred_check_branch
          %297 = sbr.rel (%p295) target = $region36
        $region35: #{tpu_custom_call.1} parent=27 // pred_region
          %s298 = smul.u32 2, %s24
          %s300 = ssub.s32 256, 256
          %301 = vsyncadd %s291, %s300
          %s302 = smul.addr %s23, 2
          %s303 = sadd.s32 %s298, %s302
          %s304 = smul.addr %s303, 128
          %s305 = scalar_lea.hbm %s2, %s304
          %s307 = sshll.u32 %s294, 4
          %s308 = int_to_ptr.vmem [resolvable:$true] %s307
          %310 = dma.vmem_to_hbm [thread:$0]  %s308, 256, %s305, %s291
        $region36: #{tpu_custom_call.1} parent=27 // pred_fallthru
          _
      $region28: #{tpu_custom_call.1} parent=5 // pred_fallthru
        _
      %p311 = scmp.le.s32.totalorder 2, %s14
      // Predicated region
      $region37: #{tpu_custom_call.1} parent=5 // pred_check
        %p312 = pneg %p311
      $region38: #{tpu_custom_call.1} parent=5 // pred_check_branch
        %314 = sbr.rel (%p312) target = $region40
      $region39: #{tpu_custom_call.1} parent=5 // pred_region
        %s315 = ssub.s32 %s14, 2
        // Predicated region
        $region41: #{tpu_custom_call.1} parent=39 // pred_check
          %p316 = pneg %p106
        $region42: #{tpu_custom_call.1} parent=39 // pred_check_branch
          %318 = sbr.rel (%p316) target = $region44
        $region43: #{tpu_custom_call.1} parent=39 // pred_region
          %s319 = sand.u32 %s91, 1
          %s320 = scalar_lea.sflag [#allocation4], %s319
          %s321 = sand.u32 %s91, 1
          %s322 = smul.addr %s321, 16
          %s323 = scalar_lea.vmem [#allocation5], %s322
          %324 = dma.done %s320, 256
        $region44: #{tpu_custom_call.1} parent=39 // pred_fallthru
          _
      $region40: #{tpu_custom_call.1} parent=5 // pred_fallthru
        _
    $region6: #{tpu_custom_call.1} parent=1 // loop_footer
      %s18 = sadd.s32 1, %s14
    $region7: #{tpu_custom_call.1} parent=1 // loop_footer_branch
      %13 = sbr.rel target = $region3
    $region8: #{tpu_custom_call.1} parent=1 // loop_exit
      _
    %325 = vsyncpa [#allocation3], 1
    %s326 = scalar_lea.sflag [#allocation3], 1
    %327 = vsyncpa %s326, 1
    %328 = vsyncpa [#allocation4], 1
    %s329 = scalar_lea.sflag [#allocation4], 1
    %330 = vsyncpa %s329, 1

</llo_original>
